<compile_context>
chip_gen: v7x
topology: tpu7x:2x2x1
jax: 0.10.0
libtpu: 0.0.40
codegen_flags: <defaults>
</compile_context>

<pallas_src>
import math
import numpy as np
import jax
import jax.numpy as jnp
from jax.experimental import pallas as pl
from jax.experimental.pallas import tpu as pltpu  # noqa: F401  (kept for clarity)


# ---------------------------------------------------------------------------
# "cfg" from the original repo (synthetic small values)
# ---------------------------------------------------------------------------
INPUT_IMG_SHAPE = (16, 16)    # (H, W) of the full image fed to roi_align
INPUT_BODY_SHAPE = (12, 12)   # (H, W) coordinate space of face_bbox
INPUT_FACE_SHAPE = (8, 8)     # (PH, PW) roi_align output size

# Static upper bound on the adaptive sampling grid (sampling_ratio=-1):
# ceil(roi_extent / pooled_size) for ROIs up to 2x the image extent.  Being a
# compile-time constant keeps the forward jittable (no device->host sync).
# TODO(synk): boxes larger than 2x the image would need a larger static bound.
MAX_SAMPLING_GRID = int(max(
    math.ceil(2 * INPUT_IMG_SHAPE[0] / INPUT_FACE_SHAPE[0]),
    math.ceil(2 * INPUT_IMG_SHAPE[1] / INPUT_FACE_SHAPE[1])))


# ---------------------------------------------------------------------------
# ROI-Align sampling-matrix construction (torchvision semantics:
# aligned=False, sampling_ratio=-1).  Sparse scatter-add build: only the 4
# bilinear taps per (output pixel, sample) are written -- no dense one_hot.
# ---------------------------------------------------------------------------
def build_roi_sampling_matrix(boxes, H, W, PH, PW, max_g):
    """boxes: (N, 4) float32 (x1, y1, x2, y2) already in image coords.
    Returns Wt: (N, H*W, PH*PW) float32 such that
      face_img[n, c] = img[n, c].reshape(H*W) @ Wt[n]   (reshaped to PH, PW).
    """
    f32 = jnp.float32
    N = boxes.shape[0]
    x1, y1, x2, y2 = boxes[:, 0], boxes[:, 1], boxes[:, 2], boxes[:, 3]
    roi_w = jnp.maximum(x2 - x1, 1.0)            # aligned=False clamps to >= 1
    roi_h = jnp.maximum(y2 - y1, 1.0)
    bin_h = roi_h / PH
    bin_w = roi_w / PW
    grid_h = jnp.ceil(roi_h / PH).astype(jnp.int32)   # sampling_ratio = -1
    grid_w = jnp.ceil(roi_w / PW).astype(jnp.int32)
    count = jnp.maximum(grid_h * grid_w, 1).astype(f32)

    # broadcast layout: (N, PH, PW, max_g, max_g)
    ph = jnp.arange(PH, dtype=f32)[None, :, None, None, None]
    pw = jnp.arange(PW, dtype=f32)[None, None, :, None, None]
    iy = jnp.arange(max_g, dtype=f32)[None, None, None, :, None]
    ix = jnp.arange(max_g, dtype=f32)[None, None, None, None, :]

    def bN(a):  # (N,) -> (N, 1, 1, 1, 1)
        return a[:, None, None, None, None]

    gh = bN(grid_h.astype(f32))
    gw = bN(grid_w.astype(f32))

    y = bN(y1) + ph * bN(bin_h) + (iy + 0.5) * bN(bin_h) / gh
    x = bN(x1) + pw * bN(bin_w) + (ix + 0.5) * bN(bin_w) / gw

    sample_mask = (iy < gh) & (ix < gw)
    in_range = (y >= -1.0) & (y <= float(H)) & (x >= -1.0) & (x <= float(W))
    valid = (sample_mask & in_range).astype(f32)        # (N, PH, PW, g, g)

    yc = jnp.maximum(y, 0.0)
    xc = jnp.maximum(x, 0.0)
    y_low0 = jnp.floor(yc).astype(jnp.int32)
    x_low0 = jnp.floor(xc).astype(jnp.int32)
    cy = y_low0 >= H - 1
    cx = x_low0 >= W - 1
    y_low = jnp.where(cy, H - 1, y_low0)
    x_low = jnp.where(cx, W - 1, x_low0)
    y_high = jnp.where(cy, H - 1, y_low0 + 1)
    x_high = jnp.where(cx, W - 1, x_low0 + 1)
    yc = jnp.where(cy, y_low.astype(f32), yc)
    xc = jnp.where(cx, x_low.astype(f32), xc)

    ly = yc - y_low.astype(f32)
    lx = xc - x_low.astype(f32)
    hy = 1.0 - ly
    hx = 1.0 - lx

    P = PH * PW
    S = max_g * max_g
    HW = H * W

    def flat(a):
        return a.reshape(N, P, S)

    inv_count = (1.0 / count)[:, None, None]                        # (N,1,1)
    wgt = jnp.stack([flat(hy * hx), flat(hy * lx),
                     flat(ly * hx), flat(ly * lx)], 0)              # (4,N,P,S)
    wgt = wgt * (flat(valid) * inv_count)[None]
    idx = jnp.stack([flat(y_low * W + x_low), flat(y_low * W + x_high),
                     flat(y_high * W + x_low), flat(y_high * W + x_high)], 0)

    n_idx = jnp.arange(N, dtype=jnp.int32)[None, :, None, None]
    p_idx = jnp.arange(P, dtype=jnp.int32)[None, None, :, None]
    target = (n_idx * HW + idx) * P + p_idx                         # (4,N,P,S)

    acc = jnp.zeros((N * HW * P,), f32)
    acc = acc.at[target.reshape(-1)].add(wgt.reshape(-1))
    return acc.reshape(N, HW, P)                                    # (N, HW, P)


def block_diag_wt(Wt):
    """(B, HW, P) -> block-diagonal (B*HW, B*P); static B, pure layout."""
    B, HW, P = Wt.shape
    out = jnp.zeros((B * HW, B * P), Wt.dtype)
    for b in range(B):                                   # tiny static unroll
        out = out.at[b * HW:(b + 1) * HW, b * P:(b + 1) * P].set(Wt[b])
    return out


# ---------------------------------------------------------------------------
# Pallas kernel: single invocation, whole batch, two MXU matmuls.
#   1x1-conv pre-pass (all images at once) -> block-diagonal ROI-Align matmul
#   -> bias + ReLU -> one lane-dense (F_out, B*P) = (8, 128) store.
# ---------------------------------------------------------------------------
def face_roi_kernel(img_ref, wt_ref, cw_ref, cb_ref, out_ref):
    """img_ref: (C, B*HW)      bf16  -- channel-major pixels of all B images
       wt_ref : (B*HW, B*P)    bf16  -- block-diag bilinear sampling matrix
       cw_ref : (F, C)         bf16  -- backbone 1x1-conv weight
       cb_ref : (F, 1)         f32   -- backbone 1x1-conv bias
       out_ref: (F, B*P)       f32   -- lane-dense output slab (B*P = 128)"""
    # backbone 1x1 conv on all images at once; it commutes with the (linear)
    # ROI-Align matmul, so doing it first raises the ROI matmul's M dim to F.
    conv = jnp.dot(cw_ref[...], img_ref[...],
                   preferred_element_type=jnp.float32)          # (F, B*HW) f32
    feat = jnp.dot(conv.astype(jnp.bfloat16), wt_ref[...],
                   preferred_element_type=jnp.float32)          # (F, B*P)  f32
    out_ref[...] = jnp.maximum(feat + cb_ref[...], 0.0)         # one 128-wide store


def face_roi_forward(img, face_bbox, conv_w, conv_b):
    """img: (B, C, H, W) f32, face_bbox: (B, 4) f32 (x1,y1,x2,y2) in body coords.
    Returns (face_feat (B, F, PH, PW) f32, bf16 kernel inputs for the check)."""
    B, C, H, W = img.shape
    PH, PW = INPUT_FACE_SHAPE
    BH, BW = INPUT_BODY_SHAPE
    IH, IW = INPUT_IMG_SHAPE
    assert (H, W) == (IH, IW)
    F_out = conv_w.shape[0]
    P = PH * PW
    HW = H * W

    # torch: prepend arange batch idx (ROI n samples image n), scale body->img.
    scale = jnp.array([IW / BW, IH / BH, IW / BW, IH / BH], jnp.float32)
    boxes = face_bbox.astype(jnp.float32) * scale[None, :]

    Wt = build_roi_sampling_matrix(boxes, H, W, PH, PW, MAX_SAMPLING_GRID)
    Wt_bd = block_diag_wt(Wt)                                # (B*HW, B*P)

    # channel-major slab (C, B*HW); pure layout plumbing.
    img_c = jnp.transpose(img, (1, 0, 2, 3)).reshape(C, B * HW)

    img_bf = img_c.astype(jnp.bfloat16)
    wt_bf = Wt_bd.astype(jnp.bfloat16)
    cw_bf = conv_w.astype(jnp.bfloat16)
    cb = conv_b.reshape(F_out, 1).astype(jnp.float32)

    out_slab = pl.pallas_call(
        face_roi_kernel,
        out_shape=jax.ShapeDtypeStruct((F_out, B * P), jnp.float32),
    )(img_bf, wt_bf, cw_bf, cb)

    face_feat = (out_slab.reshape(F_out, B, P)
                 .transpose(1, 0, 2)
                 .reshape(B, F_out, PH, PW))
    return face_feat, (img_bf, wt_bf, cw_bf, cb)


if __name__ == "__main__":
    B, C = 2, 4
    H, W = INPUT_IMG_SHAPE
    PH, PW = INPUT_FACE_SHAPE
    F_out = 8
    P = PH * PW
    HW = H * W

    key = jax.random.PRNGKey(0)
    k1, k2, k3, k4, k5 = jax.random.split(key, 5)
    img = jax.random.normal(k1, (B, C, H, W), jnp.float32)
    tl = jax.random.uniform(k2, (B, 2), minval=0.0, maxval=4.0)
    wh = jax.random.uniform(k3, (B, 2), minval=3.0, maxval=7.0)
    face_bbox = jnp.concatenate([tl, tl + wh], axis=1)           # (x1,y1,x2,y2)
    conv_w = jax.random.normal(k4, (F_out, C), jnp.float32) * 0.1
    conv_b = jax.random.normal(k5, (F_out, 1), jnp.float32) * 0.1

    fwd = jax.jit(face_roi_forward)
    face_feat, (img_bf, wt_bf, cw_bf, cb) = fwd(img, face_bbox, conv_w, conv_b)
    face_feat = jax.block_until_ready(face_feat)

    # ---- check 1: mirror the kernel dataflow in plain JAX (bf16 inputs) ----
    img_f = img_bf.astype(jnp.float32)          # (C, B*HW)
    wt_f = wt_bf.astype(jnp.float32)            # (B*HW, B*P) block-diagonal
    cw_f = cw_bf.astype(jnp.float32)
    conv_ref = (cw_f @ img_f).astype(jnp.bfloat16).astype(jnp.float32)
    ref1 = jnp.maximum(conv_ref @ wt_f + cb, 0.0)
    ref1 = ref1.reshape(F_out, B, P).transpose(1, 0, 2).reshape(B, F_out, PH, PW)
    assert np.allclose(np.asarray(face_feat), np.asarray(ref1),
                       atol=2e-2, rtol=2e-2), "kernel-path mismatch"

    # ---- check 2: original op order (roi_align -> 1x1 conv -> ReLU), f32 ----
    IH, IW = INPUT_IMG_SHAPE
    BH, BW = INPUT_BODY_SHAPE
    scale = jnp.array([IW / BW, IH / BH, IW / BW, IH / BH], jnp.float32)
    Wt32 = build_roi_sampling_matrix(face_bbox * scale[None, :], H, W, PH, PW,
                                     MAX_SAMPLING_GRID)
    face_img = jnp.einsum('bch,bhp->bcp', img.reshape(B, C, HW), Wt32)
    ref2 = jnp.maximum(jnp.einsum('fc,bcp->bfp', conv_w, face_img)
                       + conv_b.reshape(1, F_out, 1), 0.0)
    ref2 = ref2.reshape(B, F_out, PH, PW)
    assert np.allclose(np.asarray(face_feat), np.asarray(ref2),
                       atol=6e-2, rtol=6e-2), "semantic mismatch vs f32 reference"

    print("KERNEL_OK")
</pallas_src>

<mosaic_0001>
module attributes {stable_mosaic.version = 11 : i64} {
  func.func private @main(%arg0: i32) attributes {dimension_semantics = [#tpu.dimension_semantics<core_parallel>], iteration_bounds = array<i64: 2>, tpu.core_type = #tpu.core_type<sc_scalar_subcore>, window_params = []} {
    return
  }
}

module attributes {stable_mosaic.version = 11 : i64} {
  func.func private @main(%arg0: i32) attributes {dimension_semantics = [#tpu.dimension_semantics<core_parallel>], iteration_bounds = array<i64: 2>, tpu.core_type = #tpu.core_type<sc_scalar_subcore>, window_params = []} {
    return
  }
}

module attributes {stable_mosaic.version = 11 : i64} {
  func.func @face_roi_kernel(%arg0: memref<4x512xbf16, #tpu.memory_space<vmem>>, %arg1: memref<512x128xbf16, #tpu.memory_space<vmem>>, %arg2: memref<8x4xbf16, #tpu.memory_space<vmem>>, %arg3: memref<8x1xf32, #tpu.memory_space<vmem>>, %arg4: memref<8x128xf32, #tpu.memory_space<vmem>>) attributes {dimension_semantics = [], scalar_prefetch = 0 : i64, scratch_operands = 0 : i64, tpu.core_type = #tpu.core_type<tc>} {
    %c0 = arith.constant 0 : index
    %c0_0 = arith.constant 0 : index
    %0 = vector.load %arg2[%c0, %c0_0] : memref<8x4xbf16, #tpu.memory_space<vmem>>, vector<8x4xbf16>
    %c0_1 = arith.constant 0 : index
    %c0_2 = arith.constant 0 : index
    %1 = vector.load %arg0[%c0_1, %c0_2] : memref<4x512xbf16, #tpu.memory_space<vmem>>, vector<4x512xbf16>
    %cst = arith.constant dense<0.000000e+00> : vector<8x512xf32>
    %2 = tpu.matmul %0, %1, %cst {dimension_numbers = #tpu.dot_dimension_numbers<[1], [0], [0], [1], [0, 0, 1, 1], [], []>} : vector<8x4xbf16>, vector<4x512xbf16>, vector<8x512xf32> -> vector<8x512xf32>
    %3 = arith.truncf %2 : vector<8x512xf32> to vector<8x512xbf16>
    %c0_3 = arith.constant 0 : index
    %c0_4 = arith.constant 0 : index
    %4 = vector.load %arg1[%c0_3, %c0_4] : memref<512x128xbf16, #tpu.memory_space<vmem>>, vector<512x128xbf16>
    %cst_5 = arith.constant dense<0.000000e+00> : vector<8x128xf32>
    %5 = tpu.matmul %3, %4, %cst_5 {dimension_numbers = #tpu.dot_dimension_numbers<[1], [0], [0], [1], [0, 0, 1, 1], [], []>} : vector<8x512xbf16>, vector<512x128xbf16>, vector<8x128xf32> -> vector<8x128xf32>
    %c0_6 = arith.constant 0 : index
    %c0_7 = arith.constant 0 : index
    %6 = vector.load %arg3[%c0_6, %c0_7] : memref<8x1xf32, #tpu.memory_space<vmem>>, vector<8x1xf32>
    %7 = vector.broadcast %6 : vector<8x1xf32> to vector<8x128xf32>
    %8 = arith.addf %5, %7 : vector<8x128xf32>
    %cst_8 = arith.constant 0.000000e+00 : f32
    %9 = vector.broadcast %cst_8 : f32 to vector<8x128xf32>
    %10 = arith.maximumf %8, %9 : vector<8x128xf32>
    %c0_9 = arith.constant 0 : index
    %c0_10 = arith.constant 0 : index
    %11 = vector.load %arg4[%c0_9, %c0_10] : memref<8x128xf32, #tpu.memory_space<vmem>>, vector<8x128xf32>
    tpu.vector_store %arg4[%c0_9, %c0_10], %10 {strides = array<i32>} : memref<8x128xf32, #tpu.memory_space<vmem>>, vector<8x128xf32>,
    return
  }
}

</mosaic_0001>

<llo_original>
// kernel: face_roi_forward.1
$region0: #{face_roi_forward.1}
  #allocation0 [shape = 'u32[]', space=smem, size = 0x4, offset = 0x4, fixed_abs, tag = 'smem constant byte address 0x4 - core index']
  #allocation1 [shape = 'u32[144,128]{1,0:T(1,128)}', space=vmem, size = 0x12000, scoped, tag = 'internal scratch']
  %s0 = inlined_call_operand.vmem [shape: bf16[4,512], index: 0, kind: input, shape index: {}]
  %s1 = inlined_call_operand.vmem [shape: bf16[512,128], index: 1, kind: input, shape index: {}]
  %s2 = inlined_call_operand.vmem [shape: bf16[8,4], index: 2, kind: input, shape index: {}]
  %s3 = inlined_call_operand.vmem [shape: f32[8,1], index: 3, kind: input, shape index: {}]
  %s4 = inlined_call_operand.vmem [shape: f32[8,128], index: 4, kind: output, shape index: {}]
  %s5 = sld [smem:[#allocation0]]
  $region26: #{face_roi_forward.1} parent=0
    _
  %s7 = ssub.s32 1, %s5
  %s8 = scalar_select 0, %s7, %s5
  // Predicated region
  $region2: #{face_roi_forward.1} parent=0 // pred_check
    _
  $region3: #{face_roi_forward.1} parent=0 // pred_check_branch
    %10 = sbr.rel (0) target = $region5
  $region4: #{face_roi_forward.1} parent=0 // pred_region
    _
  $region5: #{face_roi_forward.1} parent=0 // pred_fallthru
    _
  // Predicated region
  $region6: #{face_roi_forward.1} parent=0 // pred_check
    _
  $region7: #{face_roi_forward.1} parent=0 // pred_check_branch
    %12 = sbr.rel (0) target = $region9
  $region8: #{face_roi_forward.1} parent=0 // pred_region
    _
  $region9: #{face_roi_forward.1} parent=0 // pred_fallthru
    _
  // Predicated region
  $region10: #{face_roi_forward.1} parent=0 // pred_check
    _
  $region11: #{face_roi_forward.1} parent=0 // pred_check_branch
    %14 = sbr.rel (0) target = $region13
  $region12: #{face_roi_forward.1} parent=0 // pred_region
    _
  $region13: #{face_roi_forward.1} parent=0 // pred_fallthru
    _
  // Predicated region
  $region14: #{face_roi_forward.1} parent=0 // pred_check
    _
  $region15: #{face_roi_forward.1} parent=0 // pred_check_branch
    %16 = sbr.rel (0) target = $region17
  $region16: #{face_roi_forward.1} parent=0 // pred_region
    _
  $region17: #{face_roi_forward.1} parent=0 // pred_fallthru
    _
  %v18 = vld [vmem:[%s2] sm:$0xf]
  %v19 = vld [vmem:[%s0] sm:$0xff]
  %v21 = vcombine.high %v19, %v19
  %v23 = vunpack.c.l.s4 1983009808
  %v24 = vunpack.c.0.s8 %v23
  %v25 = vlaneseq
  %v26 = vshrl.u32 %v25, 7
  %v27 = vsub.s32 %v24, %v26
  %v28 = vrot.slane %v19, %v27
  %v30 = vunpack.c.l.s4 1983009808
  %v31 = vunpack.c.0.s8 %v30
  %v32 = vlaneseq
  %v33 = vshrl.u32 %v32, 7
  %v34 = vsub.s32 %v31, %v33
  %v35 = vrot.slane %v21, %v34
  %v36 = vcombine.high %v28, %v28
  %v37 = vcombine.high %v35, %v35
  %vm38 = vcmask 31744
  %v40 = vsel %vm38, %v18, 0
  %vm42 = vcmask 1041408
  %v44 = vsel %vm42, %v28, 0
  %v47 = vsel %vm42, %v36, 0
  %v50 = vsel %vm42, %v35, 0
  %v53 = vsel %vm42, %v37, 0
  %55 = vmatprep.subr.bf16.mxu0 %v47
  %56 = vmatpush1.bf16.msra.mxu0 %v44
  %57 = vmatprep.subr.bf16.mxu0 0
  %58 = vmatpush1.bf16.msra.mxu0 0
  %59 = vmatprep.subr.bf16.mxu0 0
  %60 = vmatpush1.bf16.msra.mxu0 0
  %61 = vmatprep.subr.bf16.mxu0 0
  %62 = vmatpush1.bf16.msra.mxu0 0
  %63 = vmatprep.subr.bf16.mxu0 0
  %64 = vmatpush1.bf16.msra.mxu0 0
  %65 = vmatprep.subr.bf16.mxu0 0
  %66 = vmatpush1.bf16.msra.mxu0 0
  %67 = vmatprep.subr.bf16.mxu0 0
  %68 = vmatpush1.bf16.msra.mxu0 0
  %69 = vmatprep.subr.bf16.mxu0 0
  %70 = vmatpush1.bf16.msra.mxu0 0
  %71 = vmatprep.subr.bf16.mxu0 0
  %72 = vmatpush1.bf16.msra.mxu0 0
  %73 = vmatprep.subr.bf16.mxu0 0
  %74 = vmatpush1.bf16.msra.mxu0 0
  %75 = vmatprep.subr.bf16.mxu0 0
  %76 = vmatpush1.bf16.msra.mxu0 0
  %77 = vmatprep.subr.bf16.mxu0 0
  %78 = vmatpush1.bf16.msra.mxu0 0
  %79 = vmatprep.subr.bf16.mxu0 0
  %80 = vmatpush1.bf16.msra.mxu0 0
  %81 = vmatprep.subr.bf16.mxu0 0
  %82 = vmatpush1.bf16.msra.mxu0 0
  %83 = vmatprep.subr.bf16.mxu0 0
  %84 = vmatpush1.bf16.msra.mxu0 0
  %85 = vmatprep.subr.bf16.mxu0 0
  %86 = vmatpush1.bf16.msra.mxu0 0
  %87 = vmatprep.mubr.bf16.mxu0 0
  %88 = vmatmul.mubr.bf16.gmra.mrb[0].mxu0 %v40
  %v89 = vpop.f32.mrb[0].mxu0
  %v90 = vadd.f32 0.0, %v89
  %v91 = vpop.f32.mrb[0].mxu0
  %v92 = vadd.f32 0.0, %v91
  %v93 = vpop.f32.mrb[0].mxu0
  %v94 = vpop.f32.mrb[0].mxu0
  %95 = vdwg.mxu0
  %96 = vmatprep.subr.bf16.mxu0 %v53
  %97 = vmatpush1.bf16.msra.mxu0 %v50
  %98 = vmatprep.subr.bf16.mxu0 0
  %99 = vmatpush1.bf16.msra.mxu0 0
  %100 = vmatprep.subr.bf16.mxu0 0
  %101 = vmatpush1.bf16.msra.mxu0 0
  %102 = vmatprep.subr.bf16.mxu0 0
  %103 = vmatpush1.bf16.msra.mxu0 0
  %104 = vmatprep.subr.bf16.mxu0 0
  %105 = vmatpush1.bf16.msra.mxu0 0
  %106 = vmatprep.subr.bf16.mxu0 0
  %107 = vmatpush1.bf16.msra.mxu0 0
  %108 = vmatprep.subr.bf16.mxu0 0
  %109 = vmatpush1.bf16.msra.mxu0 0
  %110 = vmatprep.subr.bf16.mxu0 0
  %111 = vmatpush1.bf16.msra.mxu0 0
  %112 = vmatprep.subr.bf16.mxu0 0
  %113 = vmatpush1.bf16.msra.mxu0 0
  %114 = vmatprep.subr.bf16.mxu0 0
  %115 = vmatpush1.bf16.msra.mxu0 0
  %116 = vmatprep.subr.bf16.mxu0 0
  %117 = vmatpush1.bf16.msra.mxu0 0
  %118 = vmatprep.subr.bf16.mxu0 0
  %119 = vmatpush1.bf16.msra.mxu0 0
  %120 = vmatprep.subr.bf16.mxu0 0
  %121 = vmatpush1.bf16.msra.mxu0 0
  %122 = vmatprep.subr.bf16.mxu0 0
  %123 = vmatpush1.bf16.msra.mxu0 0
  %124 = vmatprep.subr.bf16.mxu0 0
  %125 = vmatpush1.bf16.msra.mxu0 0
  %126 = vmatprep.subr.bf16.mxu0 0
  %127 = vmatpush1.bf16.msra.mxu0 0
  %128 = vmatprep.mubr.bf16.mxu0 0
  %129 = vmatmul.mubr.bf16.gmra.mrb[0].mxu0 %v40
  %v130 = vpop.f32.mrb[0].mxu0
  %v131 = vadd.f32 0.0, %v130
  %v132 = vpop.f32.mrb[0].mxu0
  %v133 = vadd.f32 0.0, %v132
  %v134 = vpop.f32.mrb[0].mxu0
  %v135 = vpop.f32.mrb[0].mxu0
  %136 = vdwg.mxu0
  %v137 = vpack.c.bf16 %v90, %v90
  %v138 = vpack.c.bf16 %v92, %v92
  %v139 = vpack.c.bf16 %v131, %v131
  %v140 = vpack.c.bf16 %v133, %v133
  %v141 = vld [vmem:[%s1] sm:$0xf]
  %v142 = vld [vmem:[%s1 + $0x4] sm:$0xf]
  %v143 = vld [vmem:[%s1 + $0x8] sm:$0xf]
  %v144 = vld [vmem:[%s1 + $0xc] sm:$0xf]
  %v145 = vld [vmem:[%s1 + $0x10] sm:$0xf]
  %v146 = vld [vmem:[%s1 + $0x14] sm:$0xf]
  %v147 = vld [vmem:[%s1 + $0x18] sm:$0xf]
  %v148 = vld [vmem:[%s1 + $0x1c] sm:$0xf]
  %v149 = vld [vmem:[%s1 + $0x20] sm:$0xf]
  %v150 = vld [vmem:[%s1 + $0x24] sm:$0xf]
  %v151 = vld [vmem:[%s1 + $0x28] sm:$0xf]
  %v152 = vld [vmem:[%s1 + $0x2c] sm:$0xf]
  %v153 = vld [vmem:[%s1 + $0x30] sm:$0xf]
  %v154 = vld [vmem:[%s1 + $0x34] sm:$0xf]
  %v155 = vld [vmem:[%s1 + $0x38] sm:$0xf]
  %v156 = vld [vmem:[%s1 + $0x3c] sm:$0xf]
  %v157 = vld [vmem:[%s1 + $0x40] sm:$0xf]
  %v158 = vld [vmem:[%s1 + $0x44] sm:$0xf]
  %v159 = vld [vmem:[%s1 + $0x48] sm:$0xf]
  %v160 = vld [vmem:[%s1 + $0x4c] sm:$0xf]
  %v161 = vld [vmem:[%s1 + $0x50] sm:$0xf]
  %v162 = vld [vmem:[%s1 + $0x54] sm:$0xf]
  %v163 = vld [vmem:[%s1 + $0x58] sm:$0xf]
  %v164 = vld [vmem:[%s1 + $0x5c] sm:$0xf]
  %v165 = vld [vmem:[%s1 + $0x60] sm:$0xf]
  %v166 = vld [vmem:[%s1 + $0x64] sm:$0xf]
  %v167 = vld [vmem:[%s1 + $0x68] sm:$0xf]
  %v168 = vld [vmem:[%s1 + $0x6c] sm:$0xf]
  %v169 = vld [vmem:[%s1 + $0x70] sm:$0xf]
  %v170 = vld [vmem:[%s1 + $0x74] sm:$0xf]
  %v171 = vld [vmem:[%s1 + $0x78] sm:$0xf]
  %v172 = vld [vmem:[%s1 + $0x7c] sm:$0xf]
  %v173 = vld [vmem:[%s1 + $0x80] sm:$0xf]
  %v174 = vld [vmem:[%s1 + $0x84] sm:$0xf]
  %v175 = vld [vmem:[%s1 + $0x88] sm:$0xf]
  %v176 = vld [vmem:[%s1 + $0x8c] sm:$0xf]
  %v177 = vld [vmem:[%s1 + $0x90] sm:$0xf]
  %v178 = vld [vmem:[%s1 + $0x94] sm:$0xf]
  %v179 = vld [vmem:[%s1 + $0x98] sm:$0xf]
  %v180 = vld [vmem:[%s1 + $0x9c] sm:$0xf]
  %v181 = vld [vmem:[%s1 + $0xa0] sm:$0xf]
  %v182 = vld [vmem:[%s1 + $0xa4] sm:$0xf]
  %v183 = vld [vmem:[%s1 + $0xa8] sm:$0xf]
  %v184 = vld [vmem:[%s1 + $0xac] sm:$0xf]
  %v185 = vld [vmem:[%s1 + $0xb0] sm:$0xf]
  %v186 = vld [vmem:[%s1 + $0xb4] sm:$0xf]
  %v187 = vld [vmem:[%s1 + $0xb8] sm:$0xf]
  %v188 = vld [vmem:[%s1 + $0xbc] sm:$0xf]
  %v189 = vld [vmem:[%s1 + $0xc0] sm:$0xf]
  %v190 = vld [vmem:[%s1 + $0xc4] sm:$0xf]
  %v191 = vld [vmem:[%s1 + $0xc8] sm:$0xf]
  %v192 = vld [vmem:[%s1 + $0xcc] sm:$0xf]
  %v193 = vld [vmem:[%s1 + $0xd0] sm:$0xf]
  %v194 = vld [vmem:[%s1 + $0xd4] sm:$0xf]
  %v195 = vld [vmem:[%s1 + $0xd8] sm:$0xf]
  %v196 = vld [vmem:[%s1 + $0xdc] sm:$0xf]
  %v197 = vld [vmem:[%s1 + $0xe0] sm:$0xf]
  %v198 = vld [vmem:[%s1 + $0xe4] sm:$0xf]
  %v199 = vld [vmem:[%s1 + $0xe8] sm:$0xf]
  %v200 = vld [vmem:[%s1 + $0xec] sm:$0xf]
  %v201 = vld [vmem:[%s1 + $0xf0] sm:$0xf]
  %v202 = vld [vmem:[%s1 + $0xf4] sm:$0xf]
  %v203 = vld [vmem:[%s1 + $0xf8] sm:$0xf]
  %v204 = vld [vmem:[%s1 + $0xfc] sm:$0xf]
  %v205 = vld [vmem:[%s3] sm:$0xff]
  %207 = vset.pattern.permute.xlu0 0
  %208 = vperm.xlu0 %207, %v205
  %v209 = vpop.permute.xlu0 %208
  %v275 = vunpack.c.l.b16 %v141
  %v276 = vunpack.c.l.b16 %v142
  %v277 = vunpack.c.l.b16 %v143
  %v278 = vunpack.c.l.b16 %v144
  %v279 = vunpack.c.l.b16 %v145
  %v280 = vunpack.c.l.b16 %v146
  %v281 = vunpack.c.l.b16 %v147
  %v282 = vunpack.c.l.b16 %v148
  %v283 = vunpack.c.l.b16 %v149
  %v284 = vunpack.c.l.b16 %v150
  %v285 = vunpack.c.l.b16 %v151
  %v286 = vunpack.c.l.b16 %v152
  %v287 = vunpack.c.l.b16 %v153
  %v288 = vunpack.c.l.b16 %v154
  %v289 = vunpack.c.l.b16 %v155
  %v290 = vunpack.c.l.b16 %v156
  %v291 = vunpack.c.l.b16 %v157
  %v292 = vunpack.c.l.b16 %v158
  %v293 = vunpack.c.l.b16 %v159
  %v294 = vunpack.c.l.b16 %v160
  %v295 = vunpack.c.l.b16 %v161
  %v296 = vunpack.c.l.b16 %v162
  %v297 = vunpack.c.l.b16 %v163
  %v298 = vunpack.c.l.b16 %v164
  %v299 = vunpack.c.l.b16 %v165
  %v300 = vunpack.c.l.b16 %v166
  %v301 = vunpack.c.l.b16 %v167
  %v302 = vunpack.c.l.b16 %v168
  %v303 = vunpack.c.l.b16 %v169
  %v304 = vunpack.c.l.b16 %v170
  %v305 = vunpack.c.l.b16 %v171
  %v306 = vunpack.c.l.b16 %v172
  %v307 = vunpack.c.l.b16 %v173
  %v308 = vunpack.c.l.b16 %v174
  %v309 = vunpack.c.l.b16 %v175
  %v310 = vunpack.c.l.b16 %v176
  %v311 = vunpack.c.l.b16 %v177
  %v312 = vunpack.c.l.b16 %v178
  %v313 = vunpack.c.l.b16 %v179
  %v314 = vunpack.c.l.b16 %v180
  %v315 = vunpack.c.l.b16 %v181
  %v316 = vunpack.c.l.b16 %v182
  %v317 = vunpack.c.l.b16 %v183
  %v318 = vunpack.c.l.b16 %v184
  %v319 = vunpack.c.l.b16 %v185
  %v320 = vunpack.c.l.b16 %v186
  %v321 = vunpack.c.l.b16 %v187
  %v322 = vunpack.c.l.b16 %v188
  %v323 = vunpack.c.l.b16 %v189
  %v324 = vunpack.c.l.b16 %v190
  %v325 = vunpack.c.l.b16 %v191
  %v326 = vunpack.c.l.b16 %v192
  %v327 = vunpack.c.l.b16 %v193
  %v328 = vunpack.c.l.b16 %v194
  %v329 = vunpack.c.l.b16 %v195
  %v330 = vunpack.c.l.b16 %v196
  %v331 = vunpack.c.l.b16 %v197
  %v332 = vunpack.c.l.b16 %v198
  %v333 = vunpack.c.l.b16 %v199
  %v334 = vunpack.c.l.b16 %v200
  %v335 = vunpack.c.l.b16 %v201
  %v336 = vunpack.c.l.b16 %v202
  %v337 = vunpack.c.l.b16 %v203
  %v338 = vunpack.c.l.b16 %v204
  %v339 = vpack.c.b16 %v276, %v275
  %v340 = vpack.c.b16 %v278, %v277
  %v341 = vpack.c.b16 %v280, %v279
  %v342 = vpack.c.b16 %v282, %v281
  %v343 = vpack.c.b16 %v284, %v283
  %v344 = vpack.c.b16 %v286, %v285
  %v345 = vpack.c.b16 %v288, %v287
  %v346 = vpack.c.b16 %v290, %v289
  %v347 = vpack.c.b16 %v292, %v291
  %v348 = vpack.c.b16 %v294, %v293
  %v349 = vpack.c.b16 %v296, %v295
  %v350 = vpack.c.b16 %v298, %v297
  %v351 = vpack.c.b16 %v300, %v299
  %v352 = vpack.c.b16 %v302, %v301
  %v353 = vpack.c.b16 %v304, %v303
  %v354 = vpack.c.b16 %v306, %v305
  %v355 = vpack.c.b16 %v308, %v307
  %v356 = vpack.c.b16 %v310, %v309
  %v357 = vpack.c.b16 %v312, %v311
  %v358 = vpack.c.b16 %v314, %v313
  %v359 = vpack.c.b16 %v316, %v315
  %v360 = vpack.c.b16 %v318, %v317
  %v361 = vpack.c.b16 %v320, %v319
  %v362 = vpack.c.b16 %v322, %v321
  %v363 = vpack.c.b16 %v324, %v323
  %v364 = vpack.c.b16 %v326, %v325
  %v365 = vpack.c.b16 %v328, %v327
  %v366 = vpack.c.b16 %v330, %v329
  %v367 = vpack.c.b16 %v332, %v331
  %v368 = vpack.c.b16 %v334, %v333
  %v369 = vpack.c.b16 %v336, %v335
  %v370 = vpack.c.b16 %v338, %v337
  %403 = vmatprep.subr.bf16.mxu0 0
  %404 = vmatpush1.bf16.msra.mxu0 %v339
  %405 = vmatprep.subr.bf16.mxu0 0
  %406 = vmatpush1.bf16.msra.mxu0 %v340
  %407 = vmatprep.subr.bf16.mxu0 0
  %408 = vmatpush1.bf16.msra.mxu0 %v341
  %409 = vmatprep.subr.bf16.mxu0 0
  %410 = vmatpush1.bf16.msra.mxu0 %v342
  %411 = vmatprep.subr.bf16.mxu0 0
  %412 = vmatpush1.bf16.msra.mxu0 %v343
  %413 = vmatprep.subr.bf16.mxu0 0
  %414 = vmatpush1.bf16.msra.mxu0 %v344
  %415 = vmatprep.subr.bf16.mxu0 0
  %416 = vmatpush1.bf16.msra.mxu0 %v345
  %417 = vmatprep.subr.bf16.mxu0 0
  %418 = vmatpush1.bf16.msra.mxu0 %v346
  %419 = vmatprep.subr.bf16.mxu0 0
  %420 = vmatpush1.bf16.msra.mxu0 %v347
  %421 = vmatprep.subr.bf16.mxu0 0
  %422 = vmatpush1.bf16.msra.mxu0 %v348
  %423 = vmatprep.subr.bf16.mxu0 0
  %424 = vmatpush1.bf16.msra.mxu0 %v349
  %425 = vmatprep.subr.bf16.mxu0 0
  %426 = vmatpush1.bf16.msra.mxu0 %v350
  %427 = vmatprep.subr.bf16.mxu0 0
  %428 = vmatpush1.bf16.msra.mxu0 %v351
  %429 = vmatprep.subr.bf16.mxu0 0
  %430 = vmatpush1.bf16.msra.mxu0 %v352
  %431 = vmatprep.subr.bf16.mxu0 0
  %432 = vmatpush1.bf16.msra.mxu0 %v353
  %433 = vmatprep.subr.bf16.mxu0 0
  %434 = vmatpush1.bf16.msra.mxu0 %v354
  %435 = vmatprep.mubr.bf16.mxu0 %v138
  %436 = vmatmul.mubr.bf16.gmra.mrb[0].mxu0 %v137
  %v437 = vpop.f32.mrb[0].mxu0
  %v438 = vadd.f32 %v209, %v437
  %v439 = vpop.f32.mrb[0].mxu0
  %v440 = vpop.f32.mrb[0].mxu0
  %v441 = vpop.f32.mrb[0].mxu0
  %442 = vdwg.mxu0
  %443 = vmatprep.subr.bf16.mxu0 0
  %444 = vmatpush1.bf16.msra.mxu0 %v355
  %445 = vmatprep.subr.bf16.mxu0 0
  %446 = vmatpush1.bf16.msra.mxu0 %v356
  %447 = vmatprep.subr.bf16.mxu0 0
  %448 = vmatpush1.bf16.msra.mxu0 %v357
  %449 = vmatprep.subr.bf16.mxu0 0
  %450 = vmatpush1.bf16.msra.mxu0 %v358
  %451 = vmatprep.subr.bf16.mxu0 0
  %452 = vmatpush1.bf16.msra.mxu0 %v359
  %453 = vmatprep.subr.bf16.mxu0 0
  %454 = vmatpush1.bf16.msra.mxu0 %v360
  %455 = vmatprep.subr.bf16.mxu0 0
  %456 = vmatpush1.bf16.msra.mxu0 %v361
  %457 = vmatprep.subr.bf16.mxu0 0
  %458 = vmatpush1.bf16.msra.mxu0 %v362
  %459 = vmatprep.subr.bf16.mxu0 0
  %460 = vmatpush1.bf16.msra.mxu0 %v363
  %461 = vmatprep.subr.bf16.mxu0 0
  %462 = vmatpush1.bf16.msra.mxu0 %v364
  %463 = vmatprep.subr.bf16.mxu0 0
  %464 = vmatpush1.bf16.msra.mxu0 %v365
  %465 = vmatprep.subr.bf16.mxu0 0
  %466 = vmatpush1.bf16.msra.mxu0 %v366
  %467 = vmatprep.subr.bf16.mxu0 0
  %468 = vmatpush1.bf16.msra.mxu0 %v367
  %469 = vmatprep.subr.bf16.mxu0 0
  %470 = vmatpush1.bf16.msra.mxu0 %v368
  %471 = vmatprep.subr.bf16.mxu0 0
  %472 = vmatpush1.bf16.msra.mxu0 %v369
  %473 = vmatprep.subr.bf16.mxu0 0
  %474 = vmatpush1.bf16.msra.mxu0 %v370
  %475 = vmatprep.mubr.bf16.mxu0 %v140
  %476 = vmatmul.mubr.bf16.gmra.mrb[0].mxu0 %v139
  %v477 = vpop.f32.mrb[0].mxu0
  %v478 = vadd.f32 %v438, %v477
  %v479 = vpop.f32.mrb[0].mxu0
  %v480 = vpop.f32.mrb[0].mxu0
  %v481 = vpop.f32.mrb[0].mxu0
  %482 = vdwg.mxu0
  %v483 = vmax.f32 %v478, 0.0
  %484 = vst [vmem:[%s4] sm:$0xff] %v483
  // Predicated region
  $region18: #{face_roi_forward.1} parent=0 // pred_check
    _
  $region19: #{face_roi_forward.1} parent=0 // pred_check_branch
    %486 = sbr.rel (0) target = $region21
  $region20: #{face_roi_forward.1} parent=0 // pred_region
    _
  $region21: #{face_roi_forward.1} parent=0 // pred_fallthru
    _
  // Predicated region
  $region22: #{face_roi_forward.1} parent=0 // pred_check
    _
  $region23: #{face_roi_forward.1} parent=0 // pred_check_branch
    %488 = sbr.rel (0) target = $region25
  $region24: #{face_roi_forward.1} parent=0 // pred_region
    _
  $region25: #{face_roi_forward.1} parent=0 // pred_fallthru
    _

</llo_original>
